<compile_context>
chip_gen: v7x
topology: tpu7x:2x2x1
jax: 0.10.0
libtpu: 0.0.40
codegen_flags: <defaults>
</compile_context>

<pallas_src>
from functools import partial

import numpy as np
import jax
import jax.numpy as jnp
from jax.experimental import pallas as pl
from jax.experimental.pallas import tpu as pltpu

EPS = 1e-5
VMEM_LIMIT = 48 * 1024 * 1024   # fits v5e/v6e scoped budgets and v7x 64 MiB


def _round_up(a, b):
    return (a + b - 1) // b * b


# --------------------------- Pallas kernel A --------------------------------
# Stride-2 conv (as matmul) per S-tile; emits ONLY per-channel sum / sum-of-
# squares, accumulated across the (arbitrary) S-tile axis.  Padded S columns
# are all-zero patches -> conv output 0 -> contribute 0 to both sums.
def conv_stats_kernel(w1_ref, patch_ref, stats_ref):
    # w1_ref:    (ch, CKp)      bf16  conv weight (constant across grid)
    # patch_ref: (1, CKp, St)   bf16  im2col patches, channel-major
    # stats_ref: (1, ch, 2)     f32   cols: [sum, sum of squares]
    t = pl.program_id(2)

    y = jnp.dot(w1_ref[...], patch_ref[0],
                preferred_element_type=jnp.float32)              # (ch, St) MXU
    tile_stats = jnp.concatenate(
        [jnp.sum(y, axis=1, keepdims=True),
         jnp.sum(y * y, axis=1, keepdims=True)], axis=1)         # (ch, 2)

    @pl.when(t == 0)
    def _():
        stats_ref[0] = jnp.zeros_like(stats_ref[0])

    stats_ref[0] += tile_stats


# --------------------------- Pallas kernel B --------------------------------
# Re-runs the small conv matmul on the same patches tile (no y_int HBM round
# trip), then InstanceNorm (global stats) + ReLU + grouped 1x1x1 conv
# (elementwise) + LayerNorm over channels, all in channel-major (ch, St)
# layout with lane-dense bf16 stores.
def finalize_kernel(stats_ref, params_ref, w1_ref, patch_ref, out_ref, *,
                    inv_s, inv_dim):
    # stats_ref:  (1, ch, 2)       f32
    # params_ref: (ch, 8)          f32  cols: [w2_e, b2_e, g_e, be_e,
    #                                          w2_o, b2_o, g_o, be_o]
    # w1_ref:     (ch, CKp)        bf16
    # patch_ref:  (1, CKp, St)     bf16
    # out_ref:    (1, 2, ch, St)        [even output channels, odd channels]
    y = jnp.dot(w1_ref[...], patch_ref[0],
                preferred_element_type=jnp.float32)              # (ch, St)

    st = stats_ref[0]                                            # (ch, 2)
    mu = st[:, 0:1] * inv_s                                      # (ch, 1)
    var = jnp.maximum(st[:, 1:2] * inv_s - mu * mu, 0.0)         # (ch, 1)

    # InstanceNorm3d (biased variance, eps inside sqrt) + ReLU
    y = (y - mu) * jax.lax.rsqrt(var + EPS)
    y = jnp.maximum(y, 0.0)

    # Grouped 1x1x1 conv: output channels 2c (even) / 2c+1 (odd) both read
    # input channel c -> two VPU FMAs, no dense matmul.
    p = params_ref[...]                                          # (ch, 8)
    z_e = y * p[:, 0:1] + p[:, 1:2]                              # (ch, St)
    z_o = y * p[:, 4:5] + p[:, 5:6]                              # (ch, St)

    # LayerNorm over all dim = 2*ch channels (sublane-axis reductions).
    m = (jnp.sum(z_e, axis=0, keepdims=True)
         + jnp.sum(z_o, axis=0, keepdims=True)) * inv_dim        # (1, St)
    d_e = z_e - m
    d_o = z_o - m
    v = (jnp.sum(d_e * d_e, axis=0, keepdims=True)
         + jnp.sum(d_o * d_o, axis=0, keepdims=True)) * inv_dim
    inv_std = jax.lax.rsqrt(v + EPS)

    out_ref[0, 0] = (d_e * inv_std * p[:, 2:3] + p[:, 3:4]).astype(out_ref.dtype)
    out_ref[0, 1] = (d_o * inv_std * p[:, 6:7] + p[:, 7:8]).astype(out_ref.dtype)


# ------------------------------- glue (JAX) ---------------------------------
def im2col_3d_cm(x, k=3, stride=2, pad=1):
    """x: (N, C, D1, D2, D3) -> channel-major patches (N, C*k^3, S)."""
    N, C, A, B, Cc = x.shape
    xp = jnp.pad(x, ((0, 0), (0, 0), (pad, pad), (pad, pad), (pad, pad)))
    Ao = (A + 2 * pad - k) // stride + 1
    Bo = (B + 2 * pad - k) // stride + 1
    Co = (Cc + 2 * pad - k) // stride + 1
    cols = []
    for dz in range(k):
        for dy in range(k):
            for dx in range(k):
                cols.append(
                    xp[:, :,
                       dz:dz + stride * Ao:stride,
                       dy:dy + stride * Bo:stride,
                       dx:dx + stride * Co:stride])
    p = jnp.stack(cols, axis=2)                        # (N, C, k^3, Ao, Bo, Co)
    p = p.reshape(N, C * k * k * k, Ao * Bo * Co)      # (N, CK, S)
    return p, (Ao, Bo, Co)


def head_forward(x, w1, w2_flat, b2, gamma, beta, *,
                 head_conv=3, s_tile=8192, out_dtype=jnp.bfloat16):
    """x: (N, in_chans, D1, D2, D3) f32. Returns (tokens (N, S, dim), H, W, D)."""
    N = x.shape[0]
    dim = int(w2_flat.shape[0])
    assert dim % 2 == 0
    ch = dim // 2

    # im2col in bf16 (explicit accuracy decision: halves the dominant HBM
    # operand; MXU accumulates in f32).
    patches, (Ho, Wo, Do) = im2col_3d_cm(x.astype(jnp.bfloat16),
                                         k=head_conv, stride=2, pad=1)
    CK, S = int(patches.shape[1]), int(patches.shape[2])
    CKp = _round_up(CK, 8)                 # sublane-align K only (no MXU padding)

    # --- S tiling: pad S to a multiple of P * S_TILE (no S_TILE=S fallback) --
    S_TILE = min(_round_up(max(s_tile, 1), 128), _round_up(S, 128))
    T = pl.cdiv(S, S_TILE)
    P = 2 if T >= 2 else 1                 # parallel stat-chunks (v7x megacore)
    T_pad = _round_up(T, P)
    Tper = T_pad // P
    S_pad = T_pad * S_TILE

    pad_ck, pad_s = CKp - CK, S_pad - S
    if pad_ck or pad_s:
        patches = jnp.pad(patches, ((0, 0), (0, pad_ck), (0, pad_s)))

    # Conv weight (ch, Cin, k, k, k) -> (ch, CKp) bf16.
    w1_mat = w1.reshape(ch, -1).astype(jnp.bfloat16)
    if pad_ck:
        w1_mat = jnp.pad(w1_mat, ((0, 0), (0, pad_ck)))

    # Even/odd split of per-output-channel params, packed (ch, 8).
    params = jnp.stack(
        [w2_flat[0::2], b2[0::2], gamma[0::2], beta[0::2],
         w2_flat[1::2], b2[1::2], gamma[1::2], beta[1::2]],
        axis=1).astype(jnp.float32)

    # ---- pass 1: conv + InstanceNorm statistics (partial per S-chunk) -------
    stats_p = pl.pallas_call(
        conv_stats_kernel,
        out_shape=jax.ShapeDtypeStruct((N * P, ch, 2), jnp.float32),
        grid=(N, P, Tper),
        in_specs=[
            pl.BlockSpec((ch, CKp), lambda n, p, t: (0, 0)),
            pl.BlockSpec((1, CKp, S_TILE), lambda n, p, t: (n, 0, p * Tper + t)),
        ],
        out_specs=pl.BlockSpec((1, ch, 2), lambda n, p, t: (n * P + p, 0, 0)),
        compiler_params=pltpu.CompilerParams(
            dimension_semantics=("parallel", "parallel", "arbitrary"),
            vmem_limit_bytes=VMEM_LIMIT),
    )(w1_mat, patches)

    # Combine partial chunk statistics (tiny) before pass 2.
    stats = stats_p.reshape(N, P, ch, 2).sum(axis=1)             # (N, ch, 2)

    # ---- pass 2: recompute conv + IN + ReLU + grouped conv + LayerNorm ------
    out_cm = pl.pallas_call(
        partial(finalize_kernel, inv_s=1.0 / float(S), inv_dim=1.0 / float(dim)),
        out_shape=jax.ShapeDtypeStruct((N, 2, ch, S_pad), out_dtype),
        grid=(N, T_pad),
        in_specs=[
            pl.BlockSpec((1, ch, 2), lambda n, t: (n, 0, 0)),
            pl.BlockSpec((ch, 8), lambda n, t: (0, 0)),
            pl.BlockSpec((ch, CKp), lambda n, t: (0, 0)),
            pl.BlockSpec((1, CKp, S_TILE), lambda n, t: (n, 0, t)),
        ],
        out_specs=pl.BlockSpec((1, 2, ch, S_TILE), lambda n, t: (n, 0, 0, t)),
        compiler_params=pltpu.CompilerParams(
            dimension_semantics=("parallel", "parallel"),
            vmem_limit_bytes=VMEM_LIMIT),
    )(stats, params, w1_mat, patches)

    # (N, 2, ch, S_pad) -> (N, S_pad, ch, 2) -> (N, S_pad, dim): channel d =
    # 2*c + parity falls out of the pure transpose+reshape (no gather).
    tokens = jnp.transpose(out_cm, (0, 3, 2, 1)).reshape(N, S_pad, dim)
    if pad_s:
        tokens = tokens[:, :S, :]          # drop garbage LayerNorm of pad cols
    return tokens, Ho, Wo, Do


# --------------------------- pure-JAX reference ------------------------------
def head_reference(x, w1, w2_flat, b2, gamma, beta):
    dim = w2_flat.shape[0]
    y = jax.lax.conv_general_dilated(
        x, w1, window_strides=(2, 2, 2),
        padding=((1, 1), (1, 1), (1, 1)),
        dimension_numbers=("NCDHW", "OIDHW", "NCDHW"))
    mu = y.mean(axis=(2, 3, 4), keepdims=True)
    var = ((y - mu) ** 2).mean(axis=(2, 3, 4), keepdims=True)
    y = (y - mu) / jnp.sqrt(var + EPS)
    y = jnp.maximum(y, 0.0)
    z = (y[:, jnp.arange(dim) // 2]
         * w2_flat[None, :, None, None, None]
         + b2[None, :, None, None, None])
    N = x.shape[0]
    z = z.reshape(N, dim, -1).transpose(0, 2, 1)
    m = z.mean(-1, keepdims=True)
    v = ((z - m) ** 2).mean(-1, keepdims=True)
    return (z - m) / jnp.sqrt(v + EPS) * gamma + beta


# ----------------------------------- main ------------------------------------
if __name__ == "__main__":
    in_chans, head_conv, dim = 2, 3, 16
    ch = dim // 2
    N, D1, D2, D3 = 2, 16, 16, 12

    key = jax.random.PRNGKey(0)
    k1, k2, k3, k4, k5, kx = jax.random.split(key, 6)
    w1 = jax.random.normal(k1, (ch, in_chans, head_conv, head_conv, head_conv),
                           jnp.float32) * 0.1
    w2_flat = jax.random.normal(k2, (dim,), jnp.float32) * 0.5
    b2 = jax.random.normal(k3, (dim,), jnp.float32) * 0.1
    gamma = 1.0 + 0.1 * jax.random.normal(k4, (dim,), jnp.float32)
    beta = 0.1 * jax.random.normal(k5, (dim,), jnp.float32)
    x = jax.random.normal(kx, (N, in_chans, D1, D2, D3), jnp.float32)

    # bf16 conv inputs are an explicit accuracy decision (perf review): pre-
    # round x / w1 to bf16-representable values so the check below measures
    # kernel arithmetic (f32 accumulate, two-pass IN stats, bf16 output cast)
    # rather than input quantization.
    x = x.astype(jnp.bfloat16).astype(jnp.float32)
    w1 = w1.astype(jnp.bfloat16).astype(jnp.float32)

    # s_tile=128 so the S axis is actually tiled: S = 8*8*6 = 384 -> T=3 tiles,
    # padded to 4 and split across P=2 parallel stat chunks.  This exercises
    # the accumulator, the S-padding path and the partial-stats combine.
    out, H, W, D = head_forward(x, w1, w2_flat, b2, gamma, beta,
                                head_conv=head_conv, s_tile=128)
    out = jax.block_until_ready(out)

    ref = jax.block_until_ready(head_reference(x, w1, w2_flat, b2, gamma, beta))
    assert out.shape == (N, H * W * D, dim), out.shape
    assert (H, W, D) == (8, 8, 6), (H, W, D)
    np.testing.assert_allclose(np.asarray(out.astype(jnp.float32)),
                               np.asarray(ref), atol=2e-2, rtol=2e-2)

    print("KERNEL_OK")
</pallas_src>

<mosaic_0001>
module attributes {stable_mosaic.version = 11 : i64} {
  func.func @conv_stats_kernel(%arg0: i32, %arg1: i32, %arg2: i32, %arg3: memref<8x56xbf16, #tpu.memory_space<vmem>>, %arg4: memref<1x56x128xbf16, #tpu.memory_space<vmem>>, %arg5: memref<1x8x2xf32, #tpu.memory_space<vmem>>) attributes {dimension_semantics = [#tpu.dimension_semantics<parallel>, #tpu.dimension_semantics<parallel>, #tpu.dimension_semantics<arbitrary>], iteration_bounds = array<i64: 2, 2, 2>, scalar_prefetch = 0 : i64, scratch_operands = 0 : i64, tpu.core_type = #tpu.core_type<tc>, window_params = [{pipeline_mode = #tpu.pipeline_mode<synchronous>, transform_indices = @transform_0, window_bounds = array<i64: 8, 56>}, {transform_indices = @transform_1, window_bounds = array<i64: 1, 56, 128>}, {transform_indices = @transform_2, window_bounds = array<i64: 1, 8, 2>}]} {
    %c0 = arith.constant 0 : index
    %c0_0 = arith.constant 0 : index
    %0 = vector.load %arg3[%c0, %c0_0] : memref<8x56xbf16, #tpu.memory_space<vmem>>, vector<8x56xbf16>
    %c0_1 = arith.constant 0 : index
    %c0_2 = arith.constant 0 : index
    %c0_3 = arith.constant 0 : index
    %1 = vector.load %arg4[%c0_1, %c0_2, %c0_3] : memref<1x56x128xbf16, #tpu.memory_space<vmem>>, vector<1x56x128xbf16>
    %2 = vector.shape_cast %1 : vector<1x56x128xbf16> to vector<56x128xbf16>
    %cst = arith.constant dense<0.000000e+00> : vector<8x128xf32>
    %3 = tpu.matmul %0, %2, %cst {dimension_numbers = #tpu.dot_dimension_numbers<[1], [0], [0], [1], [0, 0, 1, 1], [], []>} : vector<8x56xbf16>, vector<56x128xbf16>, vector<8x128xf32> -> vector<8x128xf32>
    %cst_4 = arith.constant dense<0.000000e+00> : vector<8xf32>
    %4 = vector.multi_reduction <add>, %3, %cst_4 [1] : vector<8x128xf32> to vector<8xf32>
    %5 = vector.shape_cast %4 : vector<8xf32> to vector<8x1xf32>
    %6 = arith.mulf %3, %3 : vector<8x128xf32>
    %cst_5 = arith.constant dense<0.000000e+00> : vector<8xf32>
    %7 = vector.multi_reduction <add>, %6, %cst_5 [1] : vector<8x128xf32> to vector<8xf32>
    %8 = vector.shape_cast %7 : vector<8xf32> to vector<8x1xf32>
    %9 = tpu.concatenate %5, %8 in 1 : vector<8x1xf32>, vector<8x1xf32> -> vector<8x2xf32>
    %c0_i32 = arith.constant 0 : i32
    %10 = arith.cmpi eq, %arg2, %c0_i32 : i32
    %11 = arith.extui %10 : i1 to i32
    %c0_i32_6 = arith.constant 0 : i32
    %12 = arith.cmpi ne, %11, %c0_i32_6 : i32
    scf.if %12 {
      %cst_13 = arith.constant 0.000000e+00 : f32
      %19 = vector.broadcast %cst_13 : f32 to vector<8x2xf32>
      %c0_14 = arith.constant 0 : index
      %c0_15 = arith.constant 0 : index
      %c0_16 = arith.constant 0 : index
      %20 = vector.load %arg5[%c0_14, %c0_15, %c0_16] : memref<1x8x2xf32, #tpu.memory_space<vmem>>, vector<1x8x2xf32>
      %21 = vector.shape_cast %20 : vector<1x8x2xf32> to vector<8x2xf32>
      %22 = vector.shape_cast %19 : vector<8x2xf32> to vector<1x8x2xf32>
      tpu.vector_store %arg5[%c0_14, %c0_15, %c0_16], %22 {strides = array<i32>} : memref<1x8x2xf32, #tpu.memory_space<vmem>>, vector<1x8x2xf32>,
    } else {
    }
    %c0_7 = arith.constant 0 : index
    %c0_8 = arith.constant 0 : index
    %c0_9 = arith.constant 0 : index
    %13 = vector.load %arg5[%c0_7, %c0_8, %c0_9] : memref<1x8x2xf32, #tpu.memory_space<vmem>>, vector<1x8x2xf32>
    %14 = vector.shape_cast %13 : vector<1x8x2xf32> to vector<8x2xf32>
    %15 = arith.addf %14, %9 : vector<8x2xf32>
    %c0_10 = arith.constant 0 : index
    %c0_11 = arith.constant 0 : index
    %c0_12 = arith.constant 0 : index
    %16 = vector.load %arg5[%c0_10, %c0_11, %c0_12] : memref<1x8x2xf32, #tpu.memory_space<vmem>>, vector<1x8x2xf32>
    %17 = vector.shape_cast %16 : vector<1x8x2xf32> to vector<8x2xf32>
    %18 = vector.shape_cast %15 : vector<8x2xf32> to vector<1x8x2xf32>
    tpu.vector_store %arg5[%c0_10, %c0_11, %c0_12], %18 {strides = array<i32>} : memref<1x8x2xf32, #tpu.memory_space<vmem>>, vector<1x8x2xf32>,
    return
  }
  func.func @transform_0(%arg0: i32, %arg1: i32, %arg2: i32) -> (i32, i32) {
    %c0_i32 = arith.constant 0 : i32
    %c0_i32_0 = arith.constant 0 : i32
    %c0_i32_1 = arith.constant 0 : i32
    return %c0_i32, %c0_i32_0 : i32, i32
  }
  func.func @transform_1(%arg0: i32, %arg1: i32, %arg2: i32) -> (i32, i32, i32) {
    %c2_i32 = arith.constant 2 : i32
    %0 = arith.muli %arg1, %c2_i32 : i32
    %1 = arith.addi %0, %arg2 : i32
    %c0_i32 = arith.constant 0 : i32
    %c0_i32_0 = arith.constant 0 : i32
    return %arg0, %c0_i32, %1 : i32, i32, i32
  }
  func.func @transform_2(%arg0: i32, %arg1: i32, %arg2: i32) -> (i32, i32, i32) {
    %c2_i32 = arith.constant 2 : i32
    %0 = arith.muli %arg0, %c2_i32 : i32
    %1 = arith.addi %0, %arg1 : i32
    %c0_i32 = arith.constant 0 : i32
    %c0_i32_0 = arith.constant 0 : i32
    %c0_i32_1 = arith.constant 0 : i32
    return %1, %c0_i32, %c0_i32_0 : i32, i32, i32
  }
}

</mosaic_0001>

<llo_original>
// kernel: tpu_custom_call.1
$region0: #{tpu_custom_call.1}
  #allocation0 [shape = 'u32[]', space=smem, size = 0x4, offset = 0x4, fixed_abs, tag = 'smem constant byte address 0x4 - core index']
  #allocation1 [shape = 'u32[144,128]{1,0:T(1,128)}', space=vmem, size = 0x12000, scoped, tag = 'internal scratch']
  %s0 = inlined_call_operand.hbm [shape: bf16[8,56], index: 0, kind: input, shape index: {}]
  %s1 = inlined_call_operand.hbm [shape: bf16[2,56,512], index: 1, kind: input, shape index: {}]
  %s2 = inlined_call_operand.vmem [shape: f32[4,8,2], index: 2, kind: output, shape index: {}]
  %s3 = sld [smem:[#allocation0]]
  $region53: #{tpu_custom_call.1} parent=0
    _
  %s5 = ssub.s32 1, %s3
  %s6 = scalar_select 0, %s5, %s3
  $region1: #{tpu_custom_call.1} parent=0
    #allocation2 [shape = 'u8[2048]{0}', space=vmem, size = 0x800, scoped, tag = 'input window, operand 0, single buffered']
    #allocation3 [shape = 's32[2]{0}', space=sflag, size = 0x8, scoped, tag = 'scoped memory for tpu_custom_call.1']
    #allocation4 [shape = 'u8[28672]{0}', space=vmem, size = 0x7000, scoped, tag = 'input window, operand 1']
    #allocation5 [shape = 's32[2]{0}', space=sflag, size = 0x8, scoped, tag = 'scoped memory for tpu_custom_call.1']
    %7 = vsyncpa [#allocation3], 0
    %8 = vsyncpa [#allocation5], 0
    %s9 = scalar_lea.sflag [#allocation5], 1
    %10 = vsyncpa %s9, 0
    loop: start=0, step=1, limit=10
    $region2: #{tpu_custom_call.1} parent=1 // loop_pre_header
      _
    $region3: #{tpu_custom_call.1} parent=1 // loop_header
      %s12 = sphi 0, %s16
      %p13 = scmp.ge.s32.totalorder %s12, 10
      %s19 = sphi 0, %s38
      %s20 = sphi 0, %s34
      %s21 = sphi 0, %s30
      %s22 = sphi 0, %s19
      %s23 = sphi 0, %s20
      %s24 = sphi 0, %s21
      %s25 = sphi 0, %s22
      %s26 = sphi 0, %s23
      %s27 = sphi 0, %s24
      %s39 = sphi 0, %s39
      %s41 = sphi 0, %s39
      %s42 = sphi 0, %s41
      %s56 = sphi 0, %s42
      %s68 = sphi 0, %s70
      %s71 = sphi 0, %s68
      %s72 = sphi 0, %s71
      %s88 = sphi 0, %s72
      %s98 = sphi 0, %s100
      %s101 = sphi 0, %s98
      %s102 = sphi 0, %s101
      %s118 = sphi 0, %s102
    $region4: #{tpu_custom_call.1} parent=1 // loop_header_branch
      %15 = sbr.rel (%p13) target = $region8
    $region5: #{tpu_custom_call.1} parent=1 // loop_body
      %s17 = ssub.s32 %s12, 1
      %s18 = ssub.s32 %s12, 2
      %s28 = sadd.s32 1, %s21
      %p29 = scmp.ge.s32.totalorder %s28, 2
      %s30 = scalar_select %p29, 0, %s28
      %s31 = sadd.s32 1, %s20
      %s32 = scalar_select %p29, %s31, %s20
      %p33 = scmp.ge.s32.totalorder %s32, 2
      %s34 = scalar_select %p33, 0, %s32
      %s35 = sadd.s32 1, %s19
      %s36 = scalar_select %p33, %s35, %s19
      %p37 = scmp.ge.s32.totalorder %s36, 2
      %s38 = scalar_select %p37, 0, %s36
      %s40 = sadd.s32 %s39, 1
      %p43 = scmp.eq.s32.totalorder %s12, 7
      %p44 = scmp.ne.s32.totalorder %s39, %s41
      %p45 = scmp.eq.s32.totalorder %s12, 0
      %p46 = por %p44, %p45
      %p47 = scmp.ne.s32.totalorder %s39, %s41
      %p48 = scmp.eq.s32.totalorder %s17, 7
      %p49 = por %p47, %p48
      %p50 = scmp.ne.s32.totalorder %s41, %s42
      %p51 = scmp.eq.s32.totalorder %s17, 0
      %p52 = por %p50, %p51
      %p53 = scmp.ne.s32.totalorder %s41, %s42
      %p54 = scmp.eq.s32.totalorder %s18, 7
      %p55 = por %p53, %p54
      %p57 = scmp.ne.s32.totalorder %s42, %s56
      %p58 = scmp.eq.s32.totalorder %s18, 0
      %p59 = por %p57, %p58
      %s60 = smul.u32 %s20, 2
      %s61 = sadd.s32 %s60, %s21
      %s62 = smul.u32 %s34, 2
      %s63 = sadd.s32 %s62, %s30
      %s64 = ssub.s32 %s19, %s38
      %s65 = ssub.s32 %s61, %s63
      %s66 = sor.u32 %s64, %s65
      %p67 = scmp.eq.s32.totalorder %s66, 0
      %s69 = sadd.s32 %s68, 1
      %s70 = scalar_select %p67, %s68, %s69
      %p73 = pneg %p67
      %p74 = scmp.eq.s32.totalorder %s12, 7
      %p75 = por %p73, %p74
      %p76 = scmp.ne.s32.totalorder %s68, %s71
      %p77 = scmp.eq.s32.totalorder %s12, 0
      %p78 = por %p76, %p77
      %p79 = scmp.ne.s32.totalorder %s68, %s71
      %p80 = scmp.eq.s32.totalorder %s17, 7
      %p81 = por %p79, %p80
      %p82 = scmp.ne.s32.totalorder %s71, %s72
      %p83 = scmp.eq.s32.totalorder %s17, 0
      %p84 = por %p82, %p83
      %p85 = scmp.ne.s32.totalorder %s71, %s72
      %p86 = scmp.eq.s32.totalorder %s18, 7
      %p87 = por %p85, %p86
      %p89 = scmp.ne.s32.totalorder %s72, %s88
      %p90 = scmp.eq.s32.totalorder %s18, 0
      %p91 = por %p89, %p90
      %s92 = smul.u32 %s19, 2
      %s93 = sadd.s32 %s92, %s20
      %s94 = smul.u32 %s38, 2
      %s95 = sadd.s32 %s94, %s34
      %s96 = ssub.s32 %s93, %s95
      %p97 = scmp.eq.s32.totalorder %s96, 0
      %s99 = sadd.s32 %s98, 1
      %s100 = scalar_select %p97, %s98, %s99
      %p103 = pneg %p97
      %p104 = scmp.eq.s32.totalorder %s12, 7
      %p105 = por %p103, %p104
      %p106 = scmp.ne.s32.totalorder %s98, %s101
      %p107 = scmp.eq.s32.totalorder %s12, 0
      %p108 = por %p106, %p107
      %p109 = scmp.ne.s32.totalorder %s98, %s101
      %p110 = scmp.eq.s32.totalorder %s17, 7
      %p111 = por %p109, %p110
      %p112 = scmp.ne.s32.totalorder %s101, %s102
      %p113 = scmp.eq.s32.totalorder %s17, 0
      %p114 = por %p112, %p113
      %p115 = scmp.ne.s32.totalorder %s101, %s102
      %p116 = scmp.eq.s32.totalorder %s18, 7
      %p117 = por %p115, %p116
      %p119 = scmp.ne.s32.totalorder %s102, %s118
      %p120 = scmp.eq.s32.totalorder %s18, 0
      %p121 = por %p119, %p120
      %p122 = scmp.le.s32.totalorder 1, %s12
      %p123 = scmp.lt.s32.totalorder %s12, 9
      %p124 = pnand %p122, %p123
      %p125 = pneg %p124
      // Predicated region
      $region9: #{tpu_custom_call.1} parent=5 // pred_check
        _
      $region10: #{tpu_custom_call.1} parent=5 // pred_check_branch
        %127 = sbr.rel (%p124) target = $region12
      $region11: #{tpu_custom_call.1} parent=5 // pred_region
        %s128 = ssub.s32 %s12, 1
        // Predicated region
        $region13: #{tpu_custom_call.1} parent=11 // pred_check
          %p129 = pneg %p52
        $region14: #{tpu_custom_call.1} parent=11 // pred_check_branch
          %131 = sbr.rel (%p129) target = $region16
        $region15: #{tpu_custom_call.1} parent=11 // pred_region
          %s133 = ssub.s32 64, 64
          %134 = vsyncadd [#allocation3], %s133
          %s136 = sshll.u32 [#allocation2], 4
          %s137 = int_to_ptr.vmem [resolvable:$true] %s136
          %139 = dma.hbm_to_vmem [thread:$0]  %s0, 64, %s137, [#allocation3]
        $region16: #{tpu_custom_call.1} parent=11 // pred_fallthru
          _
      $region12: #{tpu_custom_call.1} parent=5 // pred_fallthru
        _
      %p140 = scmp.lt.s32.totalorder %s12, 8
      // Predicated region
      $region17: #{tpu_custom_call.1} parent=5 // pred_check
        %p141 = pneg %p140
      $region18: #{tpu_custom_call.1} parent=5 // pred_check_branch
        %143 = sbr.rel (%p141) target = $region20
      $region19: #{tpu_custom_call.1} parent=5 // pred_region
        // Predicated region
        $region21: #{tpu_custom_call.1} parent=19 // pred_check
          %p144 = pneg %p78
        $region22: #{tpu_custom_call.1} parent=19 // pred_check_branch
          %146 = sbr.rel (%p144) target = $region24
        $region23: #{tpu_custom_call.1} parent=19 // pred_region
          %s147 = sand.u32 %s68, 1
          %s148 = scalar_lea.sflag [#allocation5], %s147
          %s149 = sand.u32 %s68, 1
          %s150 = smul.addr %s149, 28
          %s151 = scalar_lea.vmem [#allocation4], %s150
          %s152 = smul.u32 %s20, 2
          %s153 = sadd.s32 %s152, %s21
          %s155 = ssub.s32 448, 448
          %156 = vsyncadd %s148, %s155
          %s157 = smul.addr %s19, 28
          %s158 = sadd.s32 %s153, %s157
          %s159 = smul.addr %s158, 64
          %s160 = scalar_lea.hbm %s1, %s159
          %s161 = sshll.u32 %s151, 4
          %s162 = int_to_ptr.vmem [resolvable:$true] %s161
          %167 = dma.hbm_to_vmem [thread:$0]  %s160, 448, %s162, %s148, 256, 64, 4
        $region24: #{tpu_custom_call.1} parent=19 // pred_fallthru
          _
      $region20: #{tpu_custom_call.1} parent=5 // pred_fallthru
        _
      %p168 = scmp.le.s32.totalorder 1, %s12
      %p169 = scmp.lt.s32.totalorder %s12, 9
      %p170 = pnand %p168, %p169
      %p171 = pneg %p170
      // Predicated region
      $region25: #{tpu_custom_call.1} parent=5 // pred_check
        _
      $region26: #{tpu_custom_call.1} parent=5 // pred_check_branch
        %173 = sbr.rel (%p170) target = $region28
      $region27: #{tpu_custom_call.1} parent=5 // pred_region
        %s174 = ssub.s32 %s12, 1
        // Predicated region
        $region29: #{tpu_custom_call.1} parent=27 // pred_check
          %p175 = pneg %p52
        $region30: #{tpu_custom_call.1} parent=27 // pred_check_branch
          %177 = sbr.rel (%p175) target = $region32
        $region31: #{tpu_custom_call.1} parent=27 // pred_region
          %178 = dma.done [#allocation3], 64
        $region32: #{tpu_custom_call.1} parent=27 // pred_fallthru
          _
        %s179 = sand.u32 %s71, 1
        %s180 = scalar_lea.sflag [#allocation5], %s179
        %s181 = sand.u32 %s71, 1
        %s182 = smul.addr %s181, 28
        %s183 = scalar_lea.vmem [#allocation4], %s182
        // Predicated region
        $region33: #{tpu_custom_call.1} parent=27 // pred_check
          %p184 = pneg %p84
        $region34: #{tpu_custom_call.1} parent=27 // pred_check_branch
          %186 = sbr.rel (%p184) target = $region36
        $region35: #{tpu_custom_call.1} parent=27 // pred_region
          %187 = dma.done %s180, 448
        $region36: #{tpu_custom_call.1} parent=27 // pred_fallthru
          _
        %p188 = pneg %p52
        %p189 = pneg %p49
        %s190 = sand.u32 %s71, 1
        %s191 = scalar_lea.sflag [#allocation5], %s190
        %s192 = sand.u32 %s71, 1
        %s193 = smul.addr %s192, 28
        %s194 = scalar_lea.vmem [#allocation4], %s193
        %p195 = pneg %p84
        %p196 = pneg %p81
        %p197 = pneg %p114
        %p198 = pneg %p111
        %s199 = smul.u32 %s22, 2
        %s200 = sadd.s32 %s199, %s23
        %p201 = scmp.lt.s32.totalorder %s200, 3
        %s202 = scalar_select %p201, %s200, 3
        %s203 = smul.addr %s202, 8
        %s204 = scalar_lea.vmem %s2, %s203
        %s205 = smul.u32 %s23, 2
        %s206 = sadd.s32 %s205, %s24
        %s207 = smul.u32 %s22, 2
        %s208 = sadd.s32 %s207, %s23
        %p209 = scmp.lt.s32.totalorder %s208, 3
        %s210 = scalar_select %p209, %s208, 3
        %s211 = smul.addr %s210, 8
        %s212 = scalar_lea.vmem %s2, %s211
        %s213 = smul.u32 %s22, 2
        %s214 = sadd.s32 %s213, %s23
        %v216 = vld [vmem:[#allocation2] sm:$0xf]
        %v217 = vld [vmem:[%s183] sm:$0xf]
        %v218 = vld [vmem:[%s183 + $0x4] sm:$0xf]
        %v219 = vld [vmem:[%s183 + $0x8] sm:$0xf]
        %v220 = vld [vmem:[%s183 + $0xc] sm:$0xf]
        %v221 = vld [vmem:[%s183 + $0x10] sm:$0xf]
        %v222 = vld [vmem:[%s183 + $0x14] sm:$0xf]
        %v223 = vld [vmem:[%s183 + $0x18] sm:$0xf]
        %v231 = vunpack.c.l.b16 %v217
        %v232 = vunpack.c.l.b16 %v218
        %v233 = vunpack.c.l.b16 %v219
        %v234 = vunpack.c.l.b16 %v220
        %v235 = vunpack.c.l.b16 %v221
        %v236 = vunpack.c.l.b16 %v222
        %v237 = vunpack.c.l.b16 %v223
        %v238 = vpack.c.b16 %v232, %v231
        %v239 = vpack.c.b16 %v234, %v233
        %v240 = vpack.c.b16 %v236, %v235
        %v241 = vpack.c.b16 %v237, %v237
        %vm245 = vcmask 457728
        %v247 = vsel %vm245, %v216, 0
        %vm249 = vcmask 1043456
        %v251 = vsel %vm249, %v241, 0
        %253 = vmatprep.subr.bf16.mxu0 0
        %254 = vmatpush1.bf16.msra.mxu0 %v238
        %255 = vmatprep.subr.bf16.mxu0 0
        %256 = vmatpush1.bf16.msra.mxu0 %v239
        %257 = vmatprep.subr.bf16.mxu0 0
        %258 = vmatpush1.bf16.msra.mxu0 %v240
        %259 = vmatprep.subr.bf16.mxu0 0
        %260 = vmatpush1.bf16.msra.mxu0 %v251
        %261 = vmatprep.subr.bf16.mxu0 0
        %262 = vmatpush1.bf16.msra.mxu0 0
        %263 = vmatprep.subr.bf16.mxu0 0
        %264 = vmatpush1.bf16.msra.mxu0 0
        %265 = vmatprep.subr.bf16.mxu0 0
        %266 = vmatpush1.bf16.msra.mxu0 0
        %267 = vmatprep.subr.bf16.mxu0 0
        %268 = vmatpush1.bf16.msra.mxu0 0
        %269 = vmatprep.subr.bf16.mxu0 0
        %270 = vmatpush1.bf16.msra.mxu0 0
        %271 = vmatprep.subr.bf16.mxu0 0
        %272 = vmatpush1.bf16.msra.mxu0 0
        %273 = vmatprep.subr.bf16.mxu0 0
        %274 = vmatpush1.bf16.msra.mxu0 0
        %275 = vmatprep.subr.bf16.mxu0 0
        %276 = vmatpush1.bf16.msra.mxu0 0
        %277 = vmatprep.subr.bf16.mxu0 0
        %278 = vmatpush1.bf16.msra.mxu0 0
        %279 = vmatprep.subr.bf16.mxu0 0
        %280 = vmatpush1.bf16.msra.mxu0 0
        %281 = vmatprep.subr.bf16.mxu0 0
        %282 = vmatpush1.bf16.msra.mxu0 0
        %283 = vmatprep.subr.bf16.mxu0 0
        %284 = vmatpush1.bf16.msra.mxu0 0
        %285 = vmatprep.mubr.bf16.mxu0 0
        %286 = vmatmul.mubr.bf16.gmra.mrb[0].mxu0 %v247
        %v287 = vpop.f32.mrb[0].mxu0
        %v288 = vadd.f32 0.0, %v287
        %v289 = vpop.f32.mrb[0].mxu0
        %v290 = vpop.f32.mrb[0].mxu0
        %v291 = vpop.f32.mrb[0].mxu0
        %292 = vdwg.mxu0
        %293 = vadd.xlane.f32.xlu0 %v288
        %v294 = vpop.xlane.xlu0 %293
        %v295 = vmul.f32 %v288, %v288
        %296 = vadd.xlane.f32.xlu0 %v295
        %v297 = vpop.xlane.xlu0 %296
        %vm298 = vcmask 7168
        %v299 = vsel %vm298, %v294, %v297
        %p300 = scmp.eq.s32.totalorder %s24, 0
        // Predicated region
        $region37: #{tpu_custom_call.1} parent=27 // pred_check
          %p301 = pneg %p300
        $region38: #{tpu_custom_call.1} parent=27 // pred_check_branch
          %303 = sbr.rel (%p301) target = $region40
        $region39: #{tpu_custom_call.1} parent=27 // pred_region
          %vm304 = vcmask 15360
          %305 = vst.msk [vmem:[%s212] sm:$0xff] %vm304, 0.0
        $region40: #{tpu_custom_call.1} parent=27 // pred_fallthru
          _
        %v306 = vld [vmem:[%s212] sm:$0xff]
        %v307 = vadd.f32 %v306, %v299
        %vm308 = vcmask 15360
        %309 = vst.msk [vmem:[%s212] sm:$0xff] %vm308, %v307
        %s310 = smul.u32 %s22, 2
        %s311 = sadd.s32 %s310, %s23
        %p312 = scmp.lt.s32.totalorder %s311, 3
        %s313 = scalar_select %p312, %s311, 3
        %s314 = smul.addr %s313, 8
        %s315 = scalar_lea.vmem %s2, %s314
        // Predicated region
        $region41: #{tpu_custom_call.1} parent=27 // pred_check
          %p316 = pneg %p111
        $region42: #{tpu_custom_call.1} parent=27 // pred_check_branch
          %318 = sbr.rel (%p316) target = $region44
        $region43: #{tpu_custom_call.1} parent=27 // pred_region
          %s319 = smul.u32 %s22, 2
          %s320 = sadd.s32 %s319, %s23
        $region44: #{tpu_custom_call.1} parent=27 // pred_fallthru
          _
      $region28: #{tpu_custom_call.1} parent=5 // pred_fallthru
        _
      %p321 = scmp.le.s32.totalorder 2, %s12
      // Predicated region
      $region45: #{tpu_custom_call.1} parent=5 // pred_check
        %p322 = pneg %p321
      $region46: #{tpu_custom_call.1} parent=5 // pred_check_branch
        %324 = sbr.rel (%p322) target = $region48
      $region47: #{tpu_custom_call.1} parent=5 // pred_region
        %s325 = ssub.s32 %s12, 2
        // Predicated region
        $region49: #{tpu_custom_call.1} parent=47 // pred_check
          %p326 = pneg %p117
        $region50: #{tpu_custom_call.1} parent=47 // pred_check_branch
          %328 = sbr.rel (%p326) target = $region52
        $region51: #{tpu_custom_call.1} parent=47 // pred_region
          %s329 = smul.u32 %s25, 2
          %s330 = sadd.s32 %s329, %s26
          %p331 = scmp.lt.s32.totalorder %s330, 3
          %s332 = scalar_select %p331, %s330, 3
          %s333 = smul.addr %s332, 8
          %s334 = scalar_lea.vmem %s2, %s333
        $region52: #{tpu_custom_call.1} parent=47 // pred_fallthru
          _
      $region48: #{tpu_custom_call.1} parent=5 // pred_fallthru
        _
    $region6: #{tpu_custom_call.1} parent=1 // loop_footer
      %s16 = sadd.s32 1, %s12
    $region7: #{tpu_custom_call.1} parent=1 // loop_footer_branch
      %11 = sbr.rel target = $region3
    $region8: #{tpu_custom_call.1} parent=1 // loop_exit
      _
    %335 = vsyncpa [#allocation3], 1
    %s336 = scalar_lea.sflag [#allocation3], 1
    %337 = vsyncpa %s336, 1
    %338 = vsyncpa [#allocation5], 1
    %s339 = scalar_lea.sflag [#allocation5], 1
    %340 = vsyncpa %s339, 1

</llo_original>
